<compile_context>
chip_gen: v5e
topology: v5e:2x2
jax: 0.10.0
libtpu: 0.0.40
codegen_flags: <defaults>
</compile_context>

<pallas_src>
import jax
import jax.numpy as jnp
from jax.experimental import pallas as pl
from jax.experimental.pallas import tpu as pltpu


_LANES = 128
_SUBLANES = 8


def _make_convt1x1_silu_kernel(cin: int, cout: int):
    def kernel(w_ref, b_ref, x_ref, o_ref):
        # w_ref: SMEM (Cin, Cout) scalars; b_ref: SMEM (Cout,) scalars
        # x_ref: VMEM (1, Cin, S, 128);     o_ref: VMEM (1, Cout, S, 128)
        for co in range(cout):                                  # tiny static unroll
            acc = x_ref[0, 0].astype(jnp.float32) * w_ref[0, co]
            for ci in range(1, cin):
                acc = acc + x_ref[0, ci].astype(jnp.float32) * w_ref[ci, co]
            v1 = acc + b_ref[co]                                # (S, 128) f32
            # Exact sigmoid (EUP exp + precise divide); kernel is HBM-bound so
            # the approx reciprocal offers no wall-clock win and costs accuracy.
            v2 = 1.0 / (1.0 + jnp.exp(-v1))
            o_ref[0, co] = (v1 * v2).astype(o_ref.dtype)        # dense, unmasked store
    return kernel


def _choose_sublane_tile(r: int, cin: int, cout: int,
                         vmem_budget_bytes: int = 12 << 20) -> int:
    """Largest multiple-of-8 divisor of `r` whose double-buffered in+out
    footprint stays under the budget, preferring >= 2 grid steps (v7x)."""
    per_sublane = 2 * (cin + cout) * _LANES * 4     # double-buffered bytes / sublane row
    cap = max(_SUBLANES,
              (vmem_budget_bytes // per_sublane) // _SUBLANES * _SUBLANES)
    divs = [d for d in range(_SUBLANES, min(r, cap) + 1, _SUBLANES) if r % d == 0]
    if not divs:
        return r                                    # r < 8: full extent (still legal)
    multi_step = [d for d in divs if r // d >= 2]
    return max(multi_step) if multi_step else max(divs)


def convt1x1_silu(x_nchw, weight, bias):
    """x_nchw: (N, Cin, H, W); weight: (Cin, Cout, 1, 1) (ConvTranspose2d
    layout); bias: (Cout,).  Returns silu(conv_transpose(x)) as (N, Cout, H, W)."""
    N, Cin, H, W = x_nchw.shape
    Cout = weight.shape[1]
    HW = H * W

    # Pad the spatial axis up to a multiple of 8*128 so tiles are (8k, 128)-dense.
    tile_elems = _SUBLANES * _LANES
    hw_pad = -(-HW // tile_elems) * tile_elems
    R = hw_pad // _LANES

    x_flat = x_nchw.reshape(N, Cin, HW)             # free row-major reshape (NCHW kept)
    if hw_pad != HW:
        x_flat = jnp.pad(x_flat, ((0, 0), (0, 0), (0, hw_pad - HW)))
    x4 = x_flat.reshape(N, Cin, R, _LANES)          # free reshape to dense layout

    w_mat = weight.reshape(Cin, Cout).astype(jnp.float32)
    b_vec = bias.reshape(Cout).astype(jnp.float32)

    S = _choose_sublane_tile(R, Cin, Cout)
    grid = (N, R // S)

    out4 = pl.pallas_call(
        _make_convt1x1_silu_kernel(Cin, Cout),
        out_shape=jax.ShapeDtypeStruct((N, Cout, R, _LANES), x_nchw.dtype),
        grid=grid,
        in_specs=[
            pl.BlockSpec(memory_space=pltpu.MemorySpace.SMEM),        # weights
            pl.BlockSpec(memory_space=pltpu.MemorySpace.SMEM),        # bias
            pl.BlockSpec((1, Cin, S, _LANES), lambda n, s: (n, 0, s, 0)),
        ],
        out_specs=pl.BlockSpec((1, Cout, S, _LANES), lambda n, s: (n, 0, s, 0)),
        compiler_params=pltpu.CompilerParams(
            dimension_semantics=("parallel", "parallel")),
    )(w_mat, b_vec, x4)

    out_flat = out4.reshape(N, Cout, hw_pad)[:, :, :HW]   # drop the spatial pad
    return out_flat.reshape(N, Cout, H, W)                # free reshape back to NCHW


if __name__ == "__main__":
    key = jax.random.PRNGKey(0)
    k_x, k_w, k_b = jax.random.split(key, 3)

    # Shapes implied by the module: x1 = (1, 2, 24, 4), ConvTranspose2d(2, 4, 1)
    N, Cin, H, W = 1, 2, 24, 4
    Cout = 4

    x1 = jax.random.normal(k_x, (N, Cin, H, W), dtype=jnp.float32)
    # ConvTranspose2d weight layout: (in_channels, out_channels, kH, kW)
    weight = jax.random.normal(k_w, (Cin, Cout, 1, 1), dtype=jnp.float32) * 0.5
    bias = jax.random.normal(k_b, (Cout,), dtype=jnp.float32) * 0.1

    out = convt1x1_silu(x1, weight, bias)
    jax.block_until_ready(out)

    # Pure-JAX reference
    v1_ref = (jnp.einsum("nchw,co->nohw", x1, weight.reshape(Cin, Cout))
              + bias[None, :, None, None])
    ref = v1_ref * jax.nn.sigmoid(v1_ref)
    assert out.shape == (N, Cout, H, W)
    assert jnp.allclose(out, ref, atol=1e-5, rtol=1e-5)

    print("KERNEL_OK")
</pallas_src>

<mosaic_0001>
module attributes {stable_mosaic.version = 11 : i64} {
  func.func @kernel(%arg0: i32, %arg1: i32, %arg2: memref<2x4xf32, #tpu.memory_space<smem>>, %arg3: memref<4xf32, #tpu.memory_space<smem>>, %arg4: memref<1x2x8x128xf32, #tpu.memory_space<vmem>>, %arg5: memref<1x4x8x128xf32, #tpu.memory_space<vmem>>) attributes {dimension_semantics = [#tpu.dimension_semantics<parallel>, #tpu.dimension_semantics<parallel>], iteration_bounds = array<i64: 1, 1>, scalar_prefetch = 0 : i64, scratch_operands = 0 : i64, tpu.core_type = #tpu.core_type<tc>, window_params = [{transform_indices = @transform_0, window_bounds = array<i64: 2, 4>}, {transform_indices = @transform_1, window_bounds = array<i64: 4>}, {transform_indices = @transform_2, window_bounds = array<i64: 1, 2, 8, 128>}, {transform_indices = @transform_3, window_bounds = array<i64: 1, 4, 8, 128>}]} {
    %c0 = arith.constant 0 : index
    %c0_0 = arith.constant 0 : index
    %c0_1 = arith.constant 0 : index
    %c0_2 = arith.constant 0 : index
    %0 = vector.load %arg4[%c0, %c0_0, %c0_1, %c0_2] : memref<1x2x8x128xf32, #tpu.memory_space<vmem>>, vector<1x1x8x128xf32>
    %1 = vector.shape_cast %0 : vector<1x1x8x128xf32> to vector<8x128xf32>
    %c0_3 = arith.constant 0 : index
    %c0_4 = arith.constant 0 : index
    %2 = memref.load %arg2[%c0_3, %c0_4] : memref<2x4xf32, #tpu.memory_space<smem>>
    %3 = vector.broadcast %2 : f32 to vector<8x128xf32>
    %4 = arith.mulf %1, %3 : vector<8x128xf32>
    %c0_5 = arith.constant 0 : index
    %c1 = arith.constant 1 : index
    %c0_6 = arith.constant 0 : index
    %c0_7 = arith.constant 0 : index
    %5 = vector.load %arg4[%c0_5, %c1, %c0_6, %c0_7] : memref<1x2x8x128xf32, #tpu.memory_space<vmem>>, vector<1x1x8x128xf32>
    %6 = vector.shape_cast %5 : vector<1x1x8x128xf32> to vector<8x128xf32>
    %c1_8 = arith.constant 1 : index
    %c0_9 = arith.constant 0 : index
    %7 = memref.load %arg2[%c1_8, %c0_9] : memref<2x4xf32, #tpu.memory_space<smem>>
    %8 = vector.broadcast %7 : f32 to vector<8x128xf32>
    %9 = arith.mulf %6, %8 : vector<8x128xf32>
    %10 = arith.addf %4, %9 : vector<8x128xf32>
    %c0_10 = arith.constant 0 : index
    %11 = memref.load %arg3[%c0_10] : memref<4xf32, #tpu.memory_space<smem>>
    %12 = vector.broadcast %11 : f32 to vector<8x128xf32>
    %13 = arith.addf %10, %12 : vector<8x128xf32>
    %cst = arith.constant 0.000000e+00 : f32
    %14 = vector.broadcast %cst : f32 to vector<8x128xf32>
    %15 = arith.subf %14, %13 : vector<8x128xf32>
    %16 = math.exp %15 : vector<8x128xf32>
    %cst_11 = arith.constant 1.000000e+00 : f32
    %17 = vector.broadcast %cst_11 : f32 to vector<8x128xf32>
    %18 = arith.addf %17, %16 : vector<8x128xf32>
    %cst_12 = arith.constant 1.000000e+00 : f32
    %19 = vector.broadcast %cst_12 : f32 to vector<8x128xf32>
    %20 = arith.divf %19, %18 : vector<8x128xf32>
    %21 = arith.mulf %13, %20 : vector<8x128xf32>
    %c0_13 = arith.constant 0 : index
    %c0_14 = arith.constant 0 : index
    %c0_15 = arith.constant 0 : index
    %c0_16 = arith.constant 0 : index
    %22 = vector.load %arg5[%c0_13, %c0_14, %c0_15, %c0_16] : memref<1x4x8x128xf32, #tpu.memory_space<vmem>>, vector<1x1x8x128xf32>
    %23 = vector.shape_cast %22 : vector<1x1x8x128xf32> to vector<8x128xf32>
    %24 = vector.shape_cast %21 : vector<8x128xf32> to vector<1x1x8x128xf32>
    tpu.vector_store %arg5[%c0_13, %c0_14, %c0_15, %c0_16], %24 {strides = array<i32>} : memref<1x4x8x128xf32, #tpu.memory_space<vmem>>, vector<1x1x8x128xf32>,
    %c0_17 = arith.constant 0 : index
    %c0_18 = arith.constant 0 : index
    %c0_19 = arith.constant 0 : index
    %c0_20 = arith.constant 0 : index
    %25 = vector.load %arg4[%c0_17, %c0_18, %c0_19, %c0_20] : memref<1x2x8x128xf32, #tpu.memory_space<vmem>>, vector<1x1x8x128xf32>
    %26 = vector.shape_cast %25 : vector<1x1x8x128xf32> to vector<8x128xf32>
    %c0_21 = arith.constant 0 : index
    %c1_22 = arith.constant 1 : index
    %27 = memref.load %arg2[%c0_21, %c1_22] : memref<2x4xf32, #tpu.memory_space<smem>>
    %28 = vector.broadcast %27 : f32 to vector<8x128xf32>
    %29 = arith.mulf %26, %28 : vector<8x128xf32>
    %c0_23 = arith.constant 0 : index
    %c1_24 = arith.constant 1 : index
    %c0_25 = arith.constant 0 : index
    %c0_26 = arith.constant 0 : index
    %30 = vector.load %arg4[%c0_23, %c1_24, %c0_25, %c0_26] : memref<1x2x8x128xf32, #tpu.memory_space<vmem>>, vector<1x1x8x128xf32>
    %31 = vector.shape_cast %30 : vector<1x1x8x128xf32> to vector<8x128xf32>
    %c1_27 = arith.constant 1 : index
    %c1_28 = arith.constant 1 : index
    %32 = memref.load %arg2[%c1_27, %c1_28] : memref<2x4xf32, #tpu.memory_space<smem>>
    %33 = vector.broadcast %32 : f32 to vector<8x128xf32>
    %34 = arith.mulf %31, %33 : vector<8x128xf32>
    %35 = arith.addf %29, %34 : vector<8x128xf32>
    %c1_29 = arith.constant 1 : index
    %36 = memref.load %arg3[%c1_29] : memref<4xf32, #tpu.memory_space<smem>>
    %37 = vector.broadcast %36 : f32 to vector<8x128xf32>
    %38 = arith.addf %35, %37 : vector<8x128xf32>
    %cst_30 = arith.constant 0.000000e+00 : f32
    %39 = vector.broadcast %cst_30 : f32 to vector<8x128xf32>
    %40 = arith.subf %39, %38 : vector<8x128xf32>
    %41 = math.exp %40 : vector<8x128xf32>
    %cst_31 = arith.constant 1.000000e+00 : f32
    %42 = vector.broadcast %cst_31 : f32 to vector<8x128xf32>
    %43 = arith.addf %42, %41 : vector<8x128xf32>
    %cst_32 = arith.constant 1.000000e+00 : f32
    %44 = vector.broadcast %cst_32 : f32 to vector<8x128xf32>
    %45 = arith.divf %44, %43 : vector<8x128xf32>
    %46 = arith.mulf %38, %45 : vector<8x128xf32>
    %c0_33 = arith.constant 0 : index
    %c1_34 = arith.constant 1 : index
    %c0_35 = arith.constant 0 : index
    %c0_36 = arith.constant 0 : index
    %47 = vector.load %arg5[%c0_33, %c1_34, %c0_35, %c0_36] : memref<1x4x8x128xf32, #tpu.memory_space<vmem>>, vector<1x1x8x128xf32>
    %48 = vector.shape_cast %47 : vector<1x1x8x128xf32> to vector<8x128xf32>
    %49 = vector.shape_cast %46 : vector<8x128xf32> to vector<1x1x8x128xf32>
    tpu.vector_store %arg5[%c0_33, %c1_34, %c0_35, %c0_36], %49 {strides = array<i32>} : memref<1x4x8x128xf32, #tpu.memory_space<vmem>>, vector<1x1x8x128xf32>,
    %c0_37 = arith.constant 0 : index
    %c0_38 = arith.constant 0 : index
    %c0_39 = arith.constant 0 : index
    %c0_40 = arith.constant 0 : index
    %50 = vector.load %arg4[%c0_37, %c0_38, %c0_39, %c0_40] : memref<1x2x8x128xf32, #tpu.memory_space<vmem>>, vector<1x1x8x128xf32>
    %51 = vector.shape_cast %50 : vector<1x1x8x128xf32> to vector<8x128xf32>
    %c0_41 = arith.constant 0 : index
    %c2 = arith.constant 2 : index
    %52 = memref.load %arg2[%c0_41, %c2] : memref<2x4xf32, #tpu.memory_space<smem>>
    %53 = vector.broadcast %52 : f32 to vector<8x128xf32>
    %54 = arith.mulf %51, %53 : vector<8x128xf32>
    %c0_42 = arith.constant 0 : index
    %c1_43 = arith.constant 1 : index
    %c0_44 = arith.constant 0 : index
    %c0_45 = arith.constant 0 : index
    %55 = vector.load %arg4[%c0_42, %c1_43, %c0_44, %c0_45] : memref<1x2x8x128xf32, #tpu.memory_space<vmem>>, vector<1x1x8x128xf32>
    %56 = vector.shape_cast %55 : vector<1x1x8x128xf32> to vector<8x128xf32>
    %c1_46 = arith.constant 1 : index
    %c2_47 = arith.constant 2 : index
    %57 = memref.load %arg2[%c1_46, %c2_47] : memref<2x4xf32, #tpu.memory_space<smem>>
    %58 = vector.broadcast %57 : f32 to vector<8x128xf32>
    %59 = arith.mulf %56, %58 : vector<8x128xf32>
    %60 = arith.addf %54, %59 : vector<8x128xf32>
    %c2_48 = arith.constant 2 : index
    %61 = memref.load %arg3[%c2_48] : memref<4xf32, #tpu.memory_space<smem>>
    %62 = vector.broadcast %61 : f32 to vector<8x128xf32>
    %63 = arith.addf %60, %62 : vector<8x128xf32>
    %cst_49 = arith.constant 0.000000e+00 : f32
    %64 = vector.broadcast %cst_49 : f32 to vector<8x128xf32>
    %65 = arith.subf %64, %63 : vector<8x128xf32>
    %66 = math.exp %65 : vector<8x128xf32>
    %cst_50 = arith.constant 1.000000e+00 : f32
    %67 = vector.broadcast %cst_50 : f32 to vector<8x128xf32>
    %68 = arith.addf %67, %66 : vector<8x128xf32>
    %cst_51 = arith.constant 1.000000e+00 : f32
    %69 = vector.broadcast %cst_51 : f32 to vector<8x128xf32>
    %70 = arith.divf %69, %68 : vector<8x128xf32>
    %71 = arith.mulf %63, %70 : vector<8x128xf32>
    %c0_52 = arith.constant 0 : index
    %c2_53 = arith.constant 2 : index
    %c0_54 = arith.constant 0 : index
    %c0_55 = arith.constant 0 : index
    %72 = vector.load %arg5[%c0_52, %c2_53, %c0_54, %c0_55] : memref<1x4x8x128xf32, #tpu.memory_space<vmem>>, vector<1x1x8x128xf32>
    %73 = vector.shape_cast %72 : vector<1x1x8x128xf32> to vector<8x128xf32>
    %74 = vector.shape_cast %71 : vector<8x128xf32> to vector<1x1x8x128xf32>
    tpu.vector_store %arg5[%c0_52, %c2_53, %c0_54, %c0_55], %74 {strides = array<i32>} : memref<1x4x8x128xf32, #tpu.memory_space<vmem>>, vector<1x1x8x128xf32>,
    %c0_56 = arith.constant 0 : index
    %c0_57 = arith.constant 0 : index
    %c0_58 = arith.constant 0 : index
    %c0_59 = arith.constant 0 : index
    %75 = vector.load %arg4[%c0_56, %c0_57, %c0_58, %c0_59] : memref<1x2x8x128xf32, #tpu.memory_space<vmem>>, vector<1x1x8x128xf32>
    %76 = vector.shape_cast %75 : vector<1x1x8x128xf32> to vector<8x128xf32>
    %c0_60 = arith.constant 0 : index
    %c3 = arith.constant 3 : index
    %77 = memref.load %arg2[%c0_60, %c3] : memref<2x4xf32, #tpu.memory_space<smem>>
    %78 = vector.broadcast %77 : f32 to vector<8x128xf32>
    %79 = arith.mulf %76, %78 : vector<8x128xf32>
    %c0_61 = arith.constant 0 : index
    %c1_62 = arith.constant 1 : index
    %c0_63 = arith.constant 0 : index
    %c0_64 = arith.constant 0 : index
    %80 = vector.load %arg4[%c0_61, %c1_62, %c0_63, %c0_64] : memref<1x2x8x128xf32, #tpu.memory_space<vmem>>, vector<1x1x8x128xf32>
    %81 = vector.shape_cast %80 : vector<1x1x8x128xf32> to vector<8x128xf32>
    %c1_65 = arith.constant 1 : index
    %c3_66 = arith.constant 3 : index
    %82 = memref.load %arg2[%c1_65, %c3_66] : memref<2x4xf32, #tpu.memory_space<smem>>
    %83 = vector.broadcast %82 : f32 to vector<8x128xf32>
    %84 = arith.mulf %81, %83 : vector<8x128xf32>
    %85 = arith.addf %79, %84 : vector<8x128xf32>
    %c3_67 = arith.constant 3 : index
    %86 = memref.load %arg3[%c3_67] : memref<4xf32, #tpu.memory_space<smem>>
    %87 = vector.broadcast %86 : f32 to vector<8x128xf32>
    %88 = arith.addf %85, %87 : vector<8x128xf32>
    %cst_68 = arith.constant 0.000000e+00 : f32
    %89 = vector.broadcast %cst_68 : f32 to vector<8x128xf32>
    %90 = arith.subf %89, %88 : vector<8x128xf32>
    %91 = math.exp %90 : vector<8x128xf32>
    %cst_69 = arith.constant 1.000000e+00 : f32
    %92 = vector.broadcast %cst_69 : f32 to vector<8x128xf32>
    %93 = arith.addf %92, %91 : vector<8x128xf32>
    %cst_70 = arith.constant 1.000000e+00 : f32
    %94 = vector.broadcast %cst_70 : f32 to vector<8x128xf32>
    %95 = arith.divf %94, %93 : vector<8x128xf32>
    %96 = arith.mulf %88, %95 : vector<8x128xf32>
    %c0_71 = arith.constant 0 : index
    %c3_72 = arith.constant 3 : index
    %c0_73 = arith.constant 0 : index
    %c0_74 = arith.constant 0 : index
    %97 = vector.load %arg5[%c0_71, %c3_72, %c0_73, %c0_74] : memref<1x4x8x128xf32, #tpu.memory_space<vmem>>, vector<1x1x8x128xf32>
    %98 = vector.shape_cast %97 : vector<1x1x8x128xf32> to vector<8x128xf32>
    %99 = vector.shape_cast %96 : vector<8x128xf32> to vector<1x1x8x128xf32>
    tpu.vector_store %arg5[%c0_71, %c3_72, %c0_73, %c0_74], %99 {strides = array<i32>} : memref<1x4x8x128xf32, #tpu.memory_space<vmem>>, vector<1x1x8x128xf32>,
    return
  }
  func.func @transform_0(%arg0: i32, %arg1: i32) -> (i32, i32) {
    %c0_i32 = arith.constant 0 : i32
    %c0_i32_0 = arith.constant 0 : i32
    %c0_i32_1 = arith.constant 0 : i32
    return %c0_i32, %c0_i32_0 : i32, i32
  }
  func.func @transform_1(%arg0: i32, %arg1: i32) -> i32 {
    %c0_i32 = arith.constant 0 : i32
    %c0_i32_0 = arith.constant 0 : i32
    return %c0_i32 : i32
  }
  func.func @transform_2(%arg0: i32, %arg1: i32) -> (i32, i32, i32, i32) {
    %c0_i32 = arith.constant 0 : i32
    %c0_i32_0 = arith.constant 0 : i32
    %c0_i32_1 = arith.constant 0 : i32
    return %arg0, %c0_i32, %arg1, %c0_i32_0 : i32, i32, i32, i32
  }
  func.func @transform_3(%arg0: i32, %arg1: i32) -> (i32, i32, i32, i32) {
    %c0_i32 = arith.constant 0 : i32
    %c0_i32_0 = arith.constant 0 : i32
    %c0_i32_1 = arith.constant 0 : i32
    return %arg0, %c0_i32, %arg1, %c0_i32_0 : i32, i32, i32, i32
  }
}

</mosaic_0001>

<llo_original>
// kernel: tpu_custom_call.1
$region0: #{tpu_custom_call.1}
  #allocation0 [shape = 'u32[]', space=smem, size = 0x4, offset = 0x4, fixed_abs, tag = 'smem constant byte address 0x4 - core index']
  #allocation1 [shape = 'u32[72,128]{1,0:T(1,128)}', space=vmem, size = 0x9000, scoped, tag = 'internal scratch']
  %s0 = inlined_call_operand.hbm [shape: f32[2,4], index: 0, kind: input, shape index: {}]
  %s1 = inlined_call_operand.hbm [shape: f32[4], index: 1, kind: input, shape index: {}]
  %s2 = inlined_call_operand.hbm [shape: f32[1,2,8,128], index: 2, kind: input, shape index: {}]
  %s3 = inlined_call_operand.hbm [shape: f32[1,4,8,128], index: 3, kind: output, shape index: {}]
  %s4 = sld [smem:[#allocation0]]
  $region34: #{tpu_custom_call.1} parent=0
    _
  %s6 = ssub.s32 1, %s4
  %s7 = scalar_select 0, %s6, %s4
  $region1: #{tpu_custom_call.1} parent=0
    #allocation2 [shape = 'u8[1024]{0}', space=smem, size = 0x400, scoped, tag = 'input window, operand 0, single buffered']
    #allocation3 [shape = 's32[1]{0}', space=sflag, size = 0x4, scoped, tag = 'scoped memory for tpu_custom_call.1']
    #allocation4 [shape = 's32[1]{0}', space=sflag, size = 0x4, scoped, tag = 'scoped memory for tpu_custom_call.1']
    #allocation5 [shape = 's32[1]{0}', space=sflag, size = 0x4, scoped, tag = 'scoped memory for tpu_custom_call.1']
    #allocation6 [shape = 'u8[512]{0}', space=smem, size = 0x200, scoped, tag = 'input window, operand 1, single buffered']
    #allocation7 [shape = 's32[1]{0}', space=sflag, size = 0x4, scoped, tag = 'scoped memory for tpu_custom_call.1']
    #allocation8 [shape = 'u8[8192]{0}', space=vmem, size = 0x2000, scoped, tag = 'input window, operand 2, single buffered']
    #allocation9 [shape = 'u8[16384]{0}', space=vmem, size = 0x4000, scoped, tag = 'output window, operand 0, single buffered']
    %8 = vsyncpa [#allocation5], 0
    %9 = vsyncpa [#allocation7], 0
    %10 = vsyncpa [#allocation3], 0
    %11 = vsyncpa [#allocation4], 0
    // Predicated region
    $region2: #{tpu_custom_call.1} parent=1 // pred_check
      _
    $region3: #{tpu_custom_call.1} parent=1 // pred_check_branch
      %13 = sbr.rel (0) target = $region5
    $region4: #{tpu_custom_call.1} parent=1 // pred_region
      %15 = vsyncadd [#allocation5], 0
      %s17 = sshll.u32 %s0, 4
      %s18 = int_to_ptr.hbm [resolvable:$true] %s17
      %20 = dma.hbm_to_smem %s18, 32, [#allocation2], [#allocation5]
    $region5: #{tpu_custom_call.1} parent=1 // pred_fallthru
      _
    // Predicated region
    $region6: #{tpu_custom_call.1} parent=1 // pred_check
      _
    $region7: #{tpu_custom_call.1} parent=1 // pred_check_branch
      %22 = sbr.rel (0) target = $region9
    $region8: #{tpu_custom_call.1} parent=1 // pred_region
      %24 = vsyncadd [#allocation7], 0
      %s26 = sshll.u32 %s1, 4
      %s27 = int_to_ptr.hbm [resolvable:$true] %s26
      %29 = dma.hbm_to_smem %s27, 16, [#allocation6], [#allocation7]
    $region9: #{tpu_custom_call.1} parent=1 // pred_fallthru
      _
    // Predicated region
    $region10: #{tpu_custom_call.1} parent=1 // pred_check
      _
    $region11: #{tpu_custom_call.1} parent=1 // pred_check_branch
      %31 = sbr.rel (0) target = $region13
    $region12: #{tpu_custom_call.1} parent=1 // pred_region
      %33 = vsyncadd [#allocation3], 0
      %s34 = sshll.u32 %s2, 4
      %s35 = int_to_ptr.hbm [resolvable:$true] %s34
      %s36 = sshll.u32 [#allocation8], 4
      %s37 = int_to_ptr.vmem [resolvable:$true] %s36
      %42 = dma.hbm_to_vmem [thread:$0]  %s35, 256, %s37, [#allocation3], 128, 128, 8
    $region13: #{tpu_custom_call.1} parent=1 // pred_fallthru
      _
    // Predicated region
    $region14: #{tpu_custom_call.1} parent=1 // pred_check
      _
    $region15: #{tpu_custom_call.1} parent=1 // pred_check_branch
      %44 = sbr.rel (0) target = $region17
    $region16: #{tpu_custom_call.1} parent=1 // pred_region
      %46 = dma.done [#allocation5], 32
    $region17: #{tpu_custom_call.1} parent=1 // pred_fallthru
      _
    // Predicated region
    $region18: #{tpu_custom_call.1} parent=1 // pred_check
      _
    $region19: #{tpu_custom_call.1} parent=1 // pred_check_branch
      %48 = sbr.rel (0) target = $region21
    $region20: #{tpu_custom_call.1} parent=1 // pred_region
      %50 = dma.done [#allocation7], 16
    $region21: #{tpu_custom_call.1} parent=1 // pred_fallthru
      _
    // Predicated region
    $region22: #{tpu_custom_call.1} parent=1 // pred_check
      _
    $region23: #{tpu_custom_call.1} parent=1 // pred_check_branch
      %52 = sbr.rel (0) target = $region25
    $region24: #{tpu_custom_call.1} parent=1 // pred_region
      %54 = dma.done [#allocation3], 256
    $region25: #{tpu_custom_call.1} parent=1 // pred_fallthru
      _
    %55 = sfence
    %v56 = vld [vmem:[#allocation8] sm:$0xff]
    %s57 = sld [smem:[#allocation2]]
    %v58 = vstv %s57
    %v59 = vmul.f32 %v56, %v58
    %s60 = scalar_lea.vmem [#allocation8], 8
    %v61 = vld [vmem:[%s60] sm:$0xff]
    %s62 = sld [smem:[#allocation2 + $0x80]]
    %v63 = vstv %s62
    %v64 = vmul.f32 %v61, %v63
    %v65 = vadd.f32 %v59, %v64
    %s66 = sld [smem:[#allocation6]]
    %v67 = vstv %s66
    %v68 = vadd.f32 %v65, %v67
    %v69 = vsub.f32 0.0, %v68
    %v70 = vmul.f32 %v69, 1.442695
    %v71 = vpow.pop %v70
    %v72 = vadd.f32 %v71, 1.0
    %v73 = vrcp.pop %v72
    %v74 = vmul.f32 %v72, %v73
    %v75 = vsub.f32 1.0, %v74
    %v76 = vmul.f32 %v73, %v75
    %v77 = vadd.f32 %v73, %v76
    %vm78 = vweird.f32 %v72
    %vm79 = vweird.f32 %v73
    %vm80 = vmor %vm78, %vm79
    %v81 = vsel %vm80, %v73, %v77
    %v82 = vand.u32 2147483647, %v72
    %vm83 = vcmp.eq.f32.partialorder %v82, 8.507059e+37
    %v84 = vand.u32 %v72, 2147483648
    %v85 = vor.u32 1.1754944e-38, %v84
    %v86 = vsel %vm83, %v85, %v81
    %v87 = vmul.f32 1.0, %v86
    %v88 = vmul.f32 %v68, %v87
    %89 = vst [vmem:[#allocation9] sm:$0xff] %v88
    %v90 = vld [vmem:[#allocation8] sm:$0xff]
    %s91 = sld [smem:[#allocation2 + $0x1]]
    %v92 = vstv %s91
    %v93 = vmul.f32 %v90, %v92
    %v94 = vld [vmem:[%s60] sm:$0xff]
    %s95 = sld [smem:[#allocation2 + $0x81]]
    %v96 = vstv %s95
    %v97 = vmul.f32 %v94, %v96
    %v98 = vadd.f32 %v93, %v97
    %s99 = sld [smem:[#allocation6 + $0x1]]
    %v100 = vstv %s99
    %v101 = vadd.f32 %v98, %v100
    %v102 = vsub.f32 0.0, %v101
    %v103 = vmul.f32 %v102, 1.442695
    %v104 = vpow.pop %v103
    %v105 = vadd.f32 %v104, 1.0
    %v106 = vrcp.pop %v105
    %v107 = vmul.f32 %v105, %v106
    %v108 = vsub.f32 1.0, %v107
    %v109 = vmul.f32 %v106, %v108
    %v110 = vadd.f32 %v106, %v109
    %vm111 = vweird.f32 %v105
    %vm112 = vweird.f32 %v106
    %vm113 = vmor %vm111, %vm112
    %v114 = vsel %vm113, %v106, %v110
    %v115 = vand.u32 2147483647, %v105
    %vm116 = vcmp.eq.f32.partialorder %v115, 8.507059e+37
    %v117 = vand.u32 %v105, 2147483648
    %v118 = vor.u32 1.1754944e-38, %v117
    %v119 = vsel %vm116, %v118, %v114
    %v120 = vmul.f32 1.0, %v119
    %v121 = vmul.f32 %v101, %v120
    %s122 = scalar_lea.vmem [#allocation9], 8
    %123 = vst [vmem:[%s122] sm:$0xff] %v121
    %v124 = vld [vmem:[#allocation8] sm:$0xff]
    %s125 = sld [smem:[#allocation2 + $0x2]]
    %v126 = vstv %s125
    %v127 = vmul.f32 %v124, %v126
    %v128 = vld [vmem:[%s60] sm:$0xff]
    %s129 = sld [smem:[#allocation2 + $0x82]]
    %v130 = vstv %s129
    %v131 = vmul.f32 %v128, %v130
    %v132 = vadd.f32 %v127, %v131
    %s133 = sld [smem:[#allocation6 + $0x2]]
    %v134 = vstv %s133
    %v135 = vadd.f32 %v132, %v134
    %v136 = vsub.f32 0.0, %v135
    %v137 = vmul.f32 %v136, 1.442695
    %v138 = vpow.pop %v137
    %v139 = vadd.f32 %v138, 1.0
    %v140 = vrcp.pop %v139
    %v141 = vmul.f32 %v139, %v140
    %v142 = vsub.f32 1.0, %v141
    %v143 = vmul.f32 %v140, %v142
    %v144 = vadd.f32 %v140, %v143
    %vm145 = vweird.f32 %v139
    %vm146 = vweird.f32 %v140
    %vm147 = vmor %vm145, %vm146
    %v148 = vsel %vm147, %v140, %v144
    %v149 = vand.u32 2147483647, %v139
    %vm150 = vcmp.eq.f32.partialorder %v149, 8.507059e+37
    %v151 = vand.u32 %v139, 2147483648
    %v152 = vor.u32 1.1754944e-38, %v151
    %v153 = vsel %vm150, %v152, %v148
    %v154 = vmul.f32 1.0, %v153
    %v155 = vmul.f32 %v135, %v154
    %s156 = scalar_lea.vmem [#allocation9], 16
    %157 = vst [vmem:[%s156] sm:$0xff] %v155
    %v158 = vld [vmem:[#allocation8] sm:$0xff]
    %s159 = sld [smem:[#allocation2 + $0x3]]
    %v160 = vstv %s159
    %v161 = vmul.f32 %v158, %v160
    %v162 = vld [vmem:[%s60] sm:$0xff]
    %s163 = sld [smem:[#allocation2 + $0x83]]
    %v164 = vstv %s163
    %v165 = vmul.f32 %v162, %v164
    %v166 = vadd.f32 %v161, %v165
    %s167 = sld [smem:[#allocation6 + $0x3]]
    %v168 = vstv %s167
    %v169 = vadd.f32 %v166, %v168
    %v170 = vsub.f32 0.0, %v169
    %v171 = vmul.f32 %v170, 1.442695
    %v172 = vpow.pop %v171
    %v173 = vadd.f32 %v172, 1.0
    %v174 = vrcp.pop %v173
    %v175 = vmul.f32 %v173, %v174
    %v176 = vsub.f32 1.0, %v175
    %v177 = vmul.f32 %v174, %v176
    %v178 = vadd.f32 %v174, %v177
    %vm179 = vweird.f32 %v173
    %vm180 = vweird.f32 %v174
    %vm181 = vmor %vm179, %vm180
    %v182 = vsel %vm181, %v174, %v178
    %v183 = vand.u32 2147483647, %v173
    %vm184 = vcmp.eq.f32.partialorder %v183, 8.507059e+37
    %v185 = vand.u32 %v173, 2147483648
    %v186 = vor.u32 1.1754944e-38, %v185
    %v187 = vsel %vm184, %v186, %v182
    %v188 = vmul.f32 1.0, %v187
    %v189 = vmul.f32 %v169, %v188
    %s190 = scalar_lea.vmem [#allocation9], 24
    %191 = vst [vmem:[%s190] sm:$0xff] %v189
    // Predicated region
    $region26: #{tpu_custom_call.1} parent=1 // pred_check
      _
    $region27: #{tpu_custom_call.1} parent=1 // pred_check_branch
      %193 = sbr.rel (0) target = $region29
    $region28: #{tpu_custom_call.1} parent=1 // pred_region
      %195 = vsyncadd [#allocation4], 0
      %s196 = sshll.u32 [#allocation9], 4
      %s197 = int_to_ptr.vmem [resolvable:$true] %s196
      %s198 = sshll.u32 %s3, 4
      %s199 = int_to_ptr.hbm [resolvable:$true] %s198
      %204 = dma.vmem_to_hbm [thread:$0]  %s197, 512, %s199, [#allocation4], 128, 128, 8
    $region29: #{tpu_custom_call.1} parent=1 // pred_fallthru
      _
    // Predicated region
    $region30: #{tpu_custom_call.1} parent=1 // pred_check
      _
    $region31: #{tpu_custom_call.1} parent=1 // pred_check_branch
      %206 = sbr.rel (0) target = $region33
    $region32: #{tpu_custom_call.1} parent=1 // pred_region
      %208 = dma.done [#allocation4], 512
    $region33: #{tpu_custom_call.1} parent=1 // pred_fallthru
      _
    %209 = vsyncpa [#allocation3], 1
    %210 = vsyncpa [#allocation4], 1
    %211 = vsyncpa [#allocation5], 1
    %212 = vsyncpa [#allocation7], 1

</llo_original>
